<compile_context>
chip_gen: v5e
topology: v5e:2x2
jax: 0.10.0
libtpu: 0.0.40
codegen_flags: <defaults>
</compile_context>

<pallas_src>
import math

import jax
import jax.numpy as jnp
from jax import lax
from jax.experimental import pallas as pl
from jax.experimental.pallas import tpu as pltpu


def _make_kernel(num_layers: int, num_trials: int, num_categories: int):
    """Fused (transposed) MLP + trial-softmax kernel for a fixed layer count."""
    T, C = num_trials, num_categories

    def _sigmoid(x):
        # Mathematically identical to sigmoid, but one EUP push (tanh) per
        # element instead of exp + reciprocal.
        return 0.5 * jnp.tanh(0.5 * x) + 0.5

    def kernel(theta_ref, *refs):
        # refs layout: W_in, b_in, [W_h, b_h]*num_layers, W_out, b_out, out
        out_ref = refs[-1]
        params = refs[:-1]

        theta = theta_ref[...]                           # (TB, num_input)
        w_in = params[0][...]                            # (H, num_input)
        b_in = params[1][...]                            # (H, 1)

        # h^T = W_in @ theta^T with the transpose folded into the MXU feed
        # (contract last dims of both operands).  Batch lands on the lane axis.
        x = theta if theta.dtype == w_in.dtype else theta.astype(w_in.dtype)
        h = lax.dot_general(w_in, x, (((1,), (1,)), ((), ())),
                            preferred_element_type=jnp.float32)
        h = _sigmoid(h + b_in)                           # (H, TB), f32

        # Hidden layers + sigmoid (activations stay transposed, batch on lanes).
        for l in range(num_layers):
            w = params[2 + 2 * l][...]
            b = params[3 + 2 * l][...]
            x = h if h.dtype == w.dtype else h.astype(w.dtype)
            h = _sigmoid(jnp.dot(w, x, preferred_element_type=jnp.float32) + b)

        # Output layer (no activation).  Rows are category-major: row = c*T + t.
        w_out = params[2 + 2 * num_layers][...]          # (C*T, H)
        b_out = params[3 + 2 * num_layers][...]          # (C*T, 1)
        x = h if h.dtype == w_out.dtype else h.astype(w_out.dtype)
        logits = jnp.dot(w_out, x, preferred_element_type=jnp.float32) + b_out

        # Softmax over trials for each (batch, category) pair == Softmax(dim=1)
        # of the (B, T, C) view.  Whole-block math: view as (C, T, TB) and
        # reduce over the trial (sublane) axis; exact divide so probabilities
        # sum to 1 to f32 rounding.
        tb = logits.shape[-1]
        l3 = logits.reshape(C, T, tb)                    # [c, t, b]
        m = jnp.max(l3, axis=1, keepdims=True)           # (C, 1, TB)
        e = jnp.exp(l3 - m)                              # (C, T, TB)
        s = jnp.sum(e, axis=1, keepdims=True)            # (C, 1, TB)
        # Single full-block, lane-dense store.
        out_ref[...] = (e / s).reshape(C * T, tb)

    return kernel


def _choose_batch_tile(B: int) -> int:
    """Batch tile on the lane axis: multiple of 128 (or the full B)."""
    if B <= 512:
        return B                       # single tile; block dim == full dim is legal
    # >= 2 grid steps so both v7x TensorCores get work; cap the tile so
    # double-buffered I/O + (H, TB) activations stay far inside scoped VMEM
    # while still amortizing the ~0.35us/step overhead.
    half = -(-B // 2)                  # ceil(B / 2)
    tb = ((half + 127) // 128) * 128   # round up to a multiple of 128
    return max(128, min(tb, 4096))


def conditional_categorical_net_forward(theta, params, num_trials, num_categories,
                                        *, use_bf16_matmul=False,
                                        unpermute_output=True):
    """Forward pass.

    `params` is the flat list [W_in, b_in, W_h0, b_h0, ..., W_out, b_out] with
    W stored as (in_features, out_features) and b as (1, out_features)
    (the transposed-PyTorch layout used by the pure-JAX reference).
    Returns probabilities of shape (B, num_trials, num_categories), or the raw
    lane-dense (num_categories*num_trials, B) slab (row = c*T + t) when
    unpermute_output=False for consumers that can fuse the permutation.
    """
    B, num_input = theta.shape
    T, C = num_trials, num_categories
    num_layers = (len(params) - 4) // 2
    H = params[0].shape[1]

    # ---- layout plumbing (tiny; in practice store params pre-laid-out) ------
    # Kernel wants W as (out, in), b as (out, 1), and the output layer's rows
    # permuted to category-major order: new row r = c*T + t  <-  old unit
    # j = t*C + c, so the trial softmax reduces over contiguous sublanes.
    # The un-permute is absorbed by the final reshape/transpose.
    perm = (jnp.arange(T)[None, :] * C + jnp.arange(C)[:, None]).reshape(-1)
    w_dtype = jnp.bfloat16 if use_bf16_matmul else jnp.float32
    kparams = []
    for i in range(0, len(params) - 2, 2):
        kparams.append(params[i].T.astype(w_dtype))            # (out, in)
        kparams.append(params[i + 1].T.astype(jnp.float32))    # (out, 1), f32 bias
    kparams.append(params[-2][:, perm].T.astype(w_dtype))      # (C*T, H)
    kparams.append(params[-1][:, perm].T.astype(jnp.float32))  # (C*T, 1)

    if use_bf16_matmul:
        # Pre-cast once in the wrapper (halves theta DMA); accumulation and
        # activations stay f32 via preferred_element_type.
        theta = theta.astype(jnp.bfloat16)

    TB = _choose_batch_tile(B)
    grid = (pl.cdiv(B, TB),)

    kernel = _make_kernel(num_layers, T, C)

    # Weights/biases: full blocks with constant index maps -> VMEM-resident,
    # no re-DMA across grid steps.
    param_specs = [pl.BlockSpec(p.shape, lambda i: (0, 0)) for p in kparams]

    cost = pl.CostEstimate(
        flops=2 * B * (num_input * H + num_layers * H * H + H * C * T),
        transcendentals=B * (H * (1 + num_layers) + C * T),
        bytes_accessed=int(theta.size) * theta.dtype.itemsize
                       + B * C * T * 4
                       + sum(int(p.size) * p.dtype.itemsize for p in kparams),
    )

    out_t = pl.pallas_call(
        kernel,
        grid=grid,
        out_shape=jax.ShapeDtypeStruct((C * T, B), jnp.float32),
        in_specs=[pl.BlockSpec((TB, num_input), lambda i: (i, 0))] + param_specs,
        out_specs=pl.BlockSpec((C * T, TB), lambda i: (0, i)),
        compiler_params=pltpu.CompilerParams(dimension_semantics=("parallel",)),
        cost_estimate=cost,
    )(theta, *kparams)

    if not unpermute_output:
        return out_t   # (C*T, B), row = c*T + t, batch on the last axis

    # Un-permute + un-transpose: row c*T + t, column b  ->  (b, t, c).
    # TODO(synk): when a downstream consumer exists, fuse this permutation into
    # it (or take unpermute_output=False) instead of materializing a copy.
    return out_t.reshape(C, T, B).transpose(2, 1, 0)


def _init_linear(key, fan_in, fan_out):
    """PyTorch nn.Linear default init: U(-1/sqrt(fan_in), 1/sqrt(fan_in)).
    Weight returned transposed: shape (fan_in, fan_out).  Bias shape (1, fan_out)."""
    kw, kb = jax.random.split(key)
    bound = 1.0 / math.sqrt(fan_in)
    w = jax.random.uniform(kw, (fan_in, fan_out), jnp.float32, -bound, bound)
    b = jax.random.uniform(kb, (1, fan_out), jnp.float32, -bound, bound)
    return w, b


def _reference_forward(theta, params, num_trials, num_categories):
    """Pure-JAX reference matching the PyTorch module (for correctness check)."""
    num_layers = (len(params) - 4) // 2
    h = jax.nn.sigmoid(theta @ params[0] + params[1])
    for l in range(num_layers):
        h = jax.nn.sigmoid(h @ params[2 + 2 * l] + params[3 + 2 * l])
    out = h @ params[-2] + params[-1]
    out = out.reshape(theta.shape[0], num_trials, num_categories)
    return jax.nn.softmax(out, axis=1)  # Softmax(dim=1) as in the module


if __name__ == "__main__":
    # Shapes consistent with the module defaults (num_trials > 1 so the dim=1
    # softmax is non-degenerate).
    num_input = 4
    num_categories = 2
    num_trials = 4
    num_hidden = 32
    num_layers = 2

    root = jax.random.PRNGKey(0)
    k_theta, k_in, k_h0, k_h1, k_out, k_theta_big = jax.random.split(root, 6)

    params = []
    params += list(_init_linear(k_in, num_input, num_hidden))
    params += list(_init_linear(k_h0, num_hidden, num_hidden))
    params += list(_init_linear(k_h1, num_hidden, num_hidden))
    params += list(_init_linear(k_out, num_hidden, num_trials * num_categories))

    # Tolerances: the reference match allows for default-precision MXU matmuls
    # on real hardware; the sum-to-1 check is tight because normalization now
    # uses an exact divide.
    REF_TOL = 2e-3
    SUM_TOL = 1e-5

    # ---- small batch: single grid step -------------------------------------
    B_small = 8
    theta = jax.random.normal(k_theta, (B_small, num_input), jnp.float32)
    probs = jax.block_until_ready(
        conditional_categorical_net_forward(theta, params, num_trials, num_categories))
    ref = _reference_forward(theta, params, num_trials, num_categories)
    assert probs.shape == (B_small, num_trials, num_categories)
    assert jnp.allclose(probs, ref, atol=REF_TOL, rtol=REF_TOL), "mismatch vs reference (small B)"
    assert jnp.allclose(probs.sum(axis=1), 1.0, atol=SUM_TOL), "trial probs must sum to 1"

    # ---- larger batch: exercises the multi-step parallel grid (2 x TB=512) --
    B_big = 1024
    theta_big = jax.random.normal(k_theta_big, (B_big, num_input), jnp.float32)
    probs_big = jax.block_until_ready(
        conditional_categorical_net_forward(theta_big, params, num_trials, num_categories))
    ref_big = _reference_forward(theta_big, params, num_trials, num_categories)
    assert probs_big.shape == (B_big, num_trials, num_categories)
    assert jnp.allclose(probs_big, ref_big, atol=REF_TOL, rtol=REF_TOL), "mismatch vs reference (big B)"
    assert jnp.allclose(probs_big.sum(axis=1), 1.0, atol=SUM_TOL), "trial probs must sum to 1"

    print("KERNEL_OK")
</pallas_src>

<mosaic_0001>
module attributes {stable_mosaic.version = 11 : i64} {
  func.func @kernel(%arg0: i32, %arg1: memref<8x4xf32, #tpu.memory_space<vmem>>, %arg2: memref<32x4xf32, #tpu.memory_space<vmem>>, %arg3: memref<32x1xf32, #tpu.memory_space<vmem>>, %arg4: memref<32x32xf32, #tpu.memory_space<vmem>>, %arg5: memref<32x1xf32, #tpu.memory_space<vmem>>, %arg6: memref<32x32xf32, #tpu.memory_space<vmem>>, %arg7: memref<32x1xf32, #tpu.memory_space<vmem>>, %arg8: memref<8x32xf32, #tpu.memory_space<vmem>>, %arg9: memref<8x1xf32, #tpu.memory_space<vmem>>, %arg10: memref<8x8xf32, #tpu.memory_space<vmem>>) attributes {dimension_semantics = [#tpu.dimension_semantics<parallel>], iteration_bounds = array<i64: 1>, scalar_prefetch = 0 : i64, scratch_operands = 0 : i64, tpu.core_type = #tpu.core_type<tc>, window_params = [{transform_indices = @transform_0, window_bounds = array<i64: 8, 4>}, {pipeline_mode = #tpu.pipeline_mode<synchronous>, transform_indices = @transform_1, window_bounds = array<i64: 32, 4>}, {pipeline_mode = #tpu.pipeline_mode<synchronous>, transform_indices = @transform_2, window_bounds = array<i64: 32, 1>}, {pipeline_mode = #tpu.pipeline_mode<synchronous>, transform_indices = @transform_3, window_bounds = array<i64: 32, 32>}, {pipeline_mode = #tpu.pipeline_mode<synchronous>, transform_indices = @transform_4, window_bounds = array<i64: 32, 1>}, {pipeline_mode = #tpu.pipeline_mode<synchronous>, transform_indices = @transform_5, window_bounds = array<i64: 32, 32>}, {pipeline_mode = #tpu.pipeline_mode<synchronous>, transform_indices = @transform_6, window_bounds = array<i64: 32, 1>}, {pipeline_mode = #tpu.pipeline_mode<synchronous>, transform_indices = @transform_7, window_bounds = array<i64: 8, 32>}, {pipeline_mode = #tpu.pipeline_mode<synchronous>, transform_indices = @transform_8, window_bounds = array<i64: 8, 1>}, {transform_indices = @transform_9, window_bounds = array<i64: 8, 8>}]} {
    %c0 = arith.constant 0 : index
    %c0_0 = arith.constant 0 : index
    %0 = vector.load %arg1[%c0, %c0_0] : memref<8x4xf32, #tpu.memory_space<vmem>>, vector<8x4xf32>
    %c0_1 = arith.constant 0 : index
    %c0_2 = arith.constant 0 : index
    %1 = vector.load %arg2[%c0_1, %c0_2] : memref<32x4xf32, #tpu.memory_space<vmem>>, vector<32x4xf32>
    %c0_3 = arith.constant 0 : index
    %c0_4 = arith.constant 0 : index
    %2 = vector.load %arg3[%c0_3, %c0_4] : memref<32x1xf32, #tpu.memory_space<vmem>>, vector<32x1xf32>
    %cst = arith.constant dense<0.000000e+00> : vector<32x8xf32>
    %3 = tpu.matmul %1, %0, %cst {dimension_numbers = #tpu.dot_dimension_numbers<[1], [1], [0], [0], [0, 0, 1, 0], [], []>} : vector<32x4xf32>, vector<8x4xf32>, vector<32x8xf32> -> vector<32x8xf32>
    %4 = vector.broadcast %2 : vector<32x1xf32> to vector<32x8xf32>
    %5 = arith.addf %3, %4 : vector<32x8xf32>
    %cst_5 = arith.constant 5.000000e-01 : f32
    %6 = vector.broadcast %cst_5 : f32 to vector<32x8xf32>
    %7 = arith.mulf %6, %5 : vector<32x8xf32>
    %8 = math.tanh %7 : vector<32x8xf32>
    %cst_6 = arith.constant 5.000000e-01 : f32
    %9 = vector.broadcast %cst_6 : f32 to vector<32x8xf32>
    %10 = arith.mulf %9, %8 : vector<32x8xf32>
    %cst_7 = arith.constant 5.000000e-01 : f32
    %11 = vector.broadcast %cst_7 : f32 to vector<32x8xf32>
    %12 = arith.addf %10, %11 : vector<32x8xf32>
    %c0_8 = arith.constant 0 : index
    %c0_9 = arith.constant 0 : index
    %13 = vector.load %arg4[%c0_8, %c0_9] : memref<32x32xf32, #tpu.memory_space<vmem>>, vector<32x32xf32>
    %c0_10 = arith.constant 0 : index
    %c0_11 = arith.constant 0 : index
    %14 = vector.load %arg5[%c0_10, %c0_11] : memref<32x1xf32, #tpu.memory_space<vmem>>, vector<32x1xf32>
    %cst_12 = arith.constant dense<0.000000e+00> : vector<32x8xf32>
    %15 = tpu.matmul %13, %12, %cst_12 {dimension_numbers = #tpu.dot_dimension_numbers<[1], [0], [0], [1], [0, 0, 1, 1], [], []>} : vector<32x32xf32>, vector<32x8xf32>, vector<32x8xf32> -> vector<32x8xf32>
    %16 = vector.broadcast %14 : vector<32x1xf32> to vector<32x8xf32>
    %17 = arith.addf %15, %16 : vector<32x8xf32>
    %cst_13 = arith.constant 5.000000e-01 : f32
    %18 = vector.broadcast %cst_13 : f32 to vector<32x8xf32>
    %19 = arith.mulf %18, %17 : vector<32x8xf32>
    %20 = math.tanh %19 : vector<32x8xf32>
    %cst_14 = arith.constant 5.000000e-01 : f32
    %21 = vector.broadcast %cst_14 : f32 to vector<32x8xf32>
    %22 = arith.mulf %21, %20 : vector<32x8xf32>
    %cst_15 = arith.constant 5.000000e-01 : f32
    %23 = vector.broadcast %cst_15 : f32 to vector<32x8xf32>
    %24 = arith.addf %22, %23 : vector<32x8xf32>
    %c0_16 = arith.constant 0 : index
    %c0_17 = arith.constant 0 : index
    %25 = vector.load %arg6[%c0_16, %c0_17] : memref<32x32xf32, #tpu.memory_space<vmem>>, vector<32x32xf32>
    %c0_18 = arith.constant 0 : index
    %c0_19 = arith.constant 0 : index
    %26 = vector.load %arg7[%c0_18, %c0_19] : memref<32x1xf32, #tpu.memory_space<vmem>>, vector<32x1xf32>
    %cst_20 = arith.constant dense<0.000000e+00> : vector<32x8xf32>
    %27 = tpu.matmul %25, %24, %cst_20 {dimension_numbers = #tpu.dot_dimension_numbers<[1], [0], [0], [1], [0, 0, 1, 1], [], []>} : vector<32x32xf32>, vector<32x8xf32>, vector<32x8xf32> -> vector<32x8xf32>
    %28 = vector.broadcast %26 : vector<32x1xf32> to vector<32x8xf32>
    %29 = arith.addf %27, %28 : vector<32x8xf32>
    %cst_21 = arith.constant 5.000000e-01 : f32
    %30 = vector.broadcast %cst_21 : f32 to vector<32x8xf32>
    %31 = arith.mulf %30, %29 : vector<32x8xf32>
    %32 = math.tanh %31 : vector<32x8xf32>
    %cst_22 = arith.constant 5.000000e-01 : f32
    %33 = vector.broadcast %cst_22 : f32 to vector<32x8xf32>
    %34 = arith.mulf %33, %32 : vector<32x8xf32>
    %cst_23 = arith.constant 5.000000e-01 : f32
    %35 = vector.broadcast %cst_23 : f32 to vector<32x8xf32>
    %36 = arith.addf %34, %35 : vector<32x8xf32>
    %c0_24 = arith.constant 0 : index
    %c0_25 = arith.constant 0 : index
    %37 = vector.load %arg8[%c0_24, %c0_25] : memref<8x32xf32, #tpu.memory_space<vmem>>, vector<8x32xf32>
    %c0_26 = arith.constant 0 : index
    %c0_27 = arith.constant 0 : index
    %38 = vector.load %arg9[%c0_26, %c0_27] : memref<8x1xf32, #tpu.memory_space<vmem>>, vector<8x1xf32>
    %cst_28 = arith.constant dense<0.000000e+00> : vector<8x8xf32>
    %39 = tpu.matmul %37, %36, %cst_28 {dimension_numbers = #tpu.dot_dimension_numbers<[1], [0], [0], [1], [0, 0, 1, 1], [], []>} : vector<8x32xf32>, vector<32x8xf32>, vector<8x8xf32> -> vector<8x8xf32>
    %40 = vector.broadcast %38 : vector<8x1xf32> to vector<8x8xf32>
    %41 = arith.addf %39, %40 : vector<8x8xf32>
    %42 = vector.shape_cast %41 : vector<8x8xf32> to vector<2x4x8xf32>
    %cst_29 = arith.constant dense<0xFF800000> : vector<2x8xf32>
    %43 = vector.multi_reduction <maximumf>, %42, %cst_29 [1] : vector<2x4x8xf32> to vector<2x8xf32>
    %44 = vector.shape_cast %43 : vector<2x8xf32> to vector<2x1x8xf32>
    %45 = vector.broadcast %44 : vector<2x1x8xf32> to vector<2x4x8xf32>
    %46 = arith.subf %42, %45 : vector<2x4x8xf32>
    %47 = math.exp %46 : vector<2x4x8xf32>
    %cst_30 = arith.constant dense<0.000000e+00> : vector<2x8xf32>
    %48 = vector.multi_reduction <add>, %47, %cst_30 [1] : vector<2x4x8xf32> to vector<2x8xf32>
    %49 = vector.shape_cast %48 : vector<2x8xf32> to vector<2x1x8xf32>
    %50 = vector.broadcast %49 : vector<2x1x8xf32> to vector<2x4x8xf32>
    %51 = arith.divf %47, %50 : vector<2x4x8xf32>
    %52 = vector.shape_cast %51 : vector<2x4x8xf32> to vector<8x8xf32>
    %c0_31 = arith.constant 0 : index
    %c0_32 = arith.constant 0 : index
    %53 = vector.load %arg10[%c0_31, %c0_32] : memref<8x8xf32, #tpu.memory_space<vmem>>, vector<8x8xf32>
    tpu.vector_store %arg10[%c0_31, %c0_32], %52 {strides = array<i32>} : memref<8x8xf32, #tpu.memory_space<vmem>>, vector<8x8xf32>,
    return
  }
  func.func @transform_0(%arg0: i32) -> (i32, i32) {
    %c0_i32 = arith.constant 0 : i32
    %c0_i32_0 = arith.constant 0 : i32
    return %arg0, %c0_i32 : i32, i32
  }
  func.func @transform_1(%arg0: i32) -> (i32, i32) {
    %c0_i32 = arith.constant 0 : i32
    %c0_i32_0 = arith.constant 0 : i32
    %c0_i32_1 = arith.constant 0 : i32
    return %c0_i32, %c0_i32_0 : i32, i32
  }
  func.func @transform_2(%arg0: i32) -> (i32, i32) {
    %c0_i32 = arith.constant 0 : i32
    %c0_i32_0 = arith.constant 0 : i32
    %c0_i32_1 = arith.constant 0 : i32
    return %c0_i32, %c0_i32_0 : i32, i32
  }
  func.func @transform_3(%arg0: i32) -> (i32, i32) {
    %c0_i32 = arith.constant 0 : i32
    %c0_i32_0 = arith.constant 0 : i32
    %c0_i32_1 = arith.constant 0 : i32
    return %c0_i32, %c0_i32_0 : i32, i32
  }
  func.func @transform_4(%arg0: i32) -> (i32, i32) {
    %c0_i32 = arith.constant 0 : i32
    %c0_i32_0 = arith.constant 0 : i32
    %c0_i32_1 = arith.constant 0 : i32
    return %c0_i32, %c0_i32_0 : i32, i32
  }
  func.func @transform_5(%arg0: i32) -> (i32, i32) {
    %c0_i32 = arith.constant 0 : i32
    %c0_i32_0 = arith.constant 0 : i32
    %c0_i32_1 = arith.constant 0 : i32
    return %c0_i32, %c0_i32_0 : i32, i32
  }
  func.func @transform_6(%arg0: i32) -> (i32, i32) {
    %c0_i32 = arith.constant 0 : i32
    %c0_i32_0 = arith.constant 0 : i32
    %c0_i32_1 = arith.constant 0 : i32
    return %c0_i32, %c0_i32_0 : i32, i32
  }
  func.func @transform_7(%arg0: i32) -> (i32, i32) {
    %c0_i32 = arith.constant 0 : i32
    %c0_i32_0 = arith.constant 0 : i32
    %c0_i32_1 = arith.constant 0 : i32
    return %c0_i32, %c0_i32_0 : i32, i32
  }
  func.func @transform_8(%arg0: i32) -> (i32, i32) {
    %c0_i32 = arith.constant 0 : i32
    %c0_i32_0 = arith.constant 0 : i32
    %c0_i32_1 = arith.constant 0 : i32
    return %c0_i32, %c0_i32_0 : i32, i32
  }
  func.func @transform_9(%arg0: i32) -> (i32, i32) {
    %c0_i32 = arith.constant 0 : i32
    %c0_i32_0 = arith.constant 0 : i32
    return %c0_i32, %arg0 : i32, i32
  }
}

</mosaic_0001>

<llo_original>
// kernel: tpu_custom_call.1
$region0: #{tpu_custom_call.1}
  #allocation0 [shape = 'u32[]', space=smem, size = 0x4, offset = 0x4, fixed_abs, tag = 'smem constant byte address 0x4 - core index']
  #allocation1 [shape = 'u32[72,128]{1,0:T(1,128)}', space=vmem, size = 0x9000, scoped, tag = 'internal scratch']
  %s0 = inlined_call_operand.vmem [shape: f32[8,4], index: 0, kind: input, shape index: {}]
  %s1 = inlined_call_operand.vmem [shape: f32[32,4], index: 1, kind: input, shape index: {}]
  %s2 = inlined_call_operand.vmem [shape: f32[32,1], index: 2, kind: input, shape index: {}]
  %s3 = inlined_call_operand.vmem [shape: f32[32,32], index: 3, kind: input, shape index: {}]
  %s4 = inlined_call_operand.vmem [shape: f32[32,1], index: 4, kind: input, shape index: {}]
  %s5 = inlined_call_operand.vmem [shape: f32[32,32], index: 5, kind: input, shape index: {}]
  %s6 = inlined_call_operand.vmem [shape: f32[32,1], index: 6, kind: input, shape index: {}]
  %s7 = inlined_call_operand.vmem [shape: f32[8,32], index: 7, kind: input, shape index: {}]
  %s8 = inlined_call_operand.vmem [shape: f32[8,1], index: 8, kind: input, shape index: {}]
  %s9 = inlined_call_operand.hbm [shape: f32[8,8], index: 9, kind: output, shape index: {}]
  %s10 = sld [smem:[#allocation0]]
  $region46: #{tpu_custom_call.1} parent=0
    _
  %s12 = ssub.s32 1, %s10
  %s13 = scalar_select 0, %s12, %s10
  $region1: #{tpu_custom_call.1} parent=0
    #allocation2 [shape = 'u8[4096]{0}', space=vmem, size = 0x1000, scoped, tag = 'output window, operand 0, single buffered']
    #allocation3 [shape = 's32[1]{0}', space=sflag, size = 0x4, scoped, tag = 'scoped memory for tpu_custom_call.1']
    %14 = vsyncpa [#allocation3], 0
    // Predicated region
    $region2: #{tpu_custom_call.1} parent=1 // pred_check
      _
    $region3: #{tpu_custom_call.1} parent=1 // pred_check_branch
      %16 = sbr.rel (0) target = $region5
    $region4: #{tpu_custom_call.1} parent=1 // pred_region
      _
    $region5: #{tpu_custom_call.1} parent=1 // pred_fallthru
      _
    // Predicated region
    $region6: #{tpu_custom_call.1} parent=1 // pred_check
      _
    $region7: #{tpu_custom_call.1} parent=1 // pred_check_branch
      %18 = sbr.rel (0) target = $region9
    $region8: #{tpu_custom_call.1} parent=1 // pred_region
      _
    $region9: #{tpu_custom_call.1} parent=1 // pred_fallthru
      _
    // Predicated region
    $region10: #{tpu_custom_call.1} parent=1 // pred_check
      _
    $region11: #{tpu_custom_call.1} parent=1 // pred_check_branch
      %20 = sbr.rel (0) target = $region13
    $region12: #{tpu_custom_call.1} parent=1 // pred_region
      _
    $region13: #{tpu_custom_call.1} parent=1 // pred_fallthru
      _
    // Predicated region
    $region14: #{tpu_custom_call.1} parent=1 // pred_check
      _
    $region15: #{tpu_custom_call.1} parent=1 // pred_check_branch
      %22 = sbr.rel (0) target = $region17
    $region16: #{tpu_custom_call.1} parent=1 // pred_region
      _
    $region17: #{tpu_custom_call.1} parent=1 // pred_fallthru
      _
    // Predicated region
    $region18: #{tpu_custom_call.1} parent=1 // pred_check
      _
    $region19: #{tpu_custom_call.1} parent=1 // pred_check_branch
      %24 = sbr.rel (0) target = $region21
    $region20: #{tpu_custom_call.1} parent=1 // pred_region
      _
    $region21: #{tpu_custom_call.1} parent=1 // pred_fallthru
      _
    // Predicated region
    $region22: #{tpu_custom_call.1} parent=1 // pred_check
      _
    $region23: #{tpu_custom_call.1} parent=1 // pred_check_branch
      %26 = sbr.rel (0) target = $region25
    $region24: #{tpu_custom_call.1} parent=1 // pred_region
      _
    $region25: #{tpu_custom_call.1} parent=1 // pred_fallthru
      _
    // Predicated region
    $region26: #{tpu_custom_call.1} parent=1 // pred_check
      _
    $region27: #{tpu_custom_call.1} parent=1 // pred_check_branch
      %28 = sbr.rel (0) target = $region29
    $region28: #{tpu_custom_call.1} parent=1 // pred_region
      _
    $region29: #{tpu_custom_call.1} parent=1 // pred_fallthru
      _
    // Predicated region
    $region30: #{tpu_custom_call.1} parent=1 // pred_check
      _
    $region31: #{tpu_custom_call.1} parent=1 // pred_check_branch
      %30 = sbr.rel (0) target = $region33
    $region32: #{tpu_custom_call.1} parent=1 // pred_region
      _
    $region33: #{tpu_custom_call.1} parent=1 // pred_fallthru
      _
    // Predicated region
    $region34: #{tpu_custom_call.1} parent=1 // pred_check
      _
    $region35: #{tpu_custom_call.1} parent=1 // pred_check_branch
      %32 = sbr.rel (0) target = $region37
    $region36: #{tpu_custom_call.1} parent=1 // pred_region
      _
    $region37: #{tpu_custom_call.1} parent=1 // pred_fallthru
      _
    %v33 = vld [vmem:[%s0] sm:$0xff]
    %v34 = vld [vmem:[%s1] sm:$0xff]
    %v35 = vld [vmem:[%s1 + $0x8] sm:$0xff]
    %v36 = vld [vmem:[%s1 + $0x10] sm:$0xff]
    %v37 = vld [vmem:[%s1 + $0x18] sm:$0xff]
    %v38 = vld [vmem:[%s2] sm:$0xff]
    %v39 = vld [vmem:[%s2 + $0x8] sm:$0xff]
    %v40 = vld [vmem:[%s2 + $0x10] sm:$0xff]
    %v41 = vld [vmem:[%s2 + $0x18] sm:$0xff]
    %43 = vset.pattern.permute.xlu0 0
    %44 = vperm.xlu0 %43, %v38
    %v45 = vpop.permute.xlu0 %44
    %48 = vset.pattern.permute.xlu0 0
    %49 = vperm.xlu0 %48, %v39
    %v50 = vpop.permute.xlu0 %49
    %53 = vset.pattern.permute.xlu0 0
    %54 = vperm.xlu0 %53, %v40
    %v55 = vpop.permute.xlu0 %54
    %58 = vset.pattern.permute.xlu0 0
    %59 = vperm.xlu0 %58, %v41
    %v60 = vpop.permute.xlu0 %59
    %vm62 = vcmask 31744
    %v64 = vsel %vm62, %v34, 0
    %v67 = vsel %vm62, %v35, 0
    %v70 = vsel %vm62, %v36, 0
    %v73 = vsel %vm62, %v37, 0
    %v76 = vsel %vm62, %v33, 0
    %78 = vmatpush.xpose.msra.mxu0 0.0
    %79 = vmatpush.xpose.msra.mxu0 0.0
    %80 = vmatpush.xpose.msra.mxu0 0.0
    %81 = vmatpush.xpose.msra.mxu0 0.0
    %82 = vmatpush.xpose.msra.mxu0 0.0
    %83 = vmatpush.xpose.msra.mxu0 0.0
    %84 = vmatpush.xpose.msra.mxu0 0.0
    %85 = vmatpush.xpose.msra.mxu0 0.0
    %86 = vmatpush.xpose.msra.mxu0 0.0
    %87 = vmatpush.xpose.msra.mxu0 0.0
    %88 = vmatpush.xpose.msra.mxu0 0.0
    %89 = vmatpush.xpose.msra.mxu0 0.0
    %90 = vmatpush.xpose.msra.mxu0 0.0
    %91 = vmatpush.xpose.msra.mxu0 0.0
    %92 = vmatpush.xpose.msra.mxu0 0.0
    %93 = vmatpush.xpose.msra.mxu0 %v76
    %94 = vmatmul.f32.gmra.mxu0 %v64
    %v95 = vpop.f32.mrf.mxu0
    %v96 = vadd.f32 %v45, %v95
    %97 = vmatmul.f32.gmra.mxu0 %v67
    %v98 = vpop.f32.mrf.mxu0
    %v99 = vadd.f32 %v50, %v98
    %100 = vmatmul.f32.gmra.mxu0 %v70
    %v101 = vpop.f32.mrf.mxu0
    %v102 = vadd.f32 %v55, %v101
    %103 = vmatmul.f32.gmra.mxu0 %v73
    %v104 = vpop.f32.mrf.mxu0
    %v105 = vadd.f32 %v60, %v104
    %106 = vdwg.mxu0
    %v107 = vmul.f32 %v96, 0.5
    %v108 = vmul.f32 %v99, 0.5
    %v109 = vmul.f32 %v102, 0.5
    %v110 = vmul.f32 %v105, 0.5
    %v111 = vtanh.pop %v107
    %v112 = vtanh.pop %v108
    %v113 = vtanh.pop %v109
    %v114 = vtanh.pop %v110
    %v115 = vmul.f32 %v111, 0.5
    %v116 = vmul.f32 %v112, 0.5
    %v117 = vmul.f32 %v113, 0.5
    %v118 = vmul.f32 %v114, 0.5
    %v119 = vadd.f32 %v115, 0.5
    %v120 = vadd.f32 %v116, 0.5
    %v121 = vadd.f32 %v117, 0.5
    %v122 = vadd.f32 %v118, 0.5
    %v123 = vld [vmem:[%s3] sm:$0xff]
    %v124 = vld [vmem:[%s3 + $0x8] sm:$0xff]
    %v125 = vld [vmem:[%s3 + $0x10] sm:$0xff]
    %v126 = vld [vmem:[%s3 + $0x18] sm:$0xff]
    %v127 = vld [vmem:[%s4] sm:$0xff]
    %v128 = vld [vmem:[%s4 + $0x8] sm:$0xff]
    %v129 = vld [vmem:[%s4 + $0x10] sm:$0xff]
    %v130 = vld [vmem:[%s4 + $0x18] sm:$0xff]
    %132 = vset.pattern.permute.xlu0 0
    %133 = vperm.xlu0 %132, %v127
    %v134 = vpop.permute.xlu0 %133
    %137 = vset.pattern.permute.xlu0 0
    %138 = vperm.xlu0 %137, %v128
    %v139 = vpop.permute.xlu0 %138
    %142 = vset.pattern.permute.xlu0 0
    %143 = vperm.xlu0 %142, %v129
    %v144 = vpop.permute.xlu0 %143
    %147 = vset.pattern.permute.xlu0 0
    %148 = vperm.xlu0 %147, %v130
    %v149 = vpop.permute.xlu0 %148
    %vm151 = vcmask 261120
    %v153 = vsel %vm151, %v123, 0
    %v156 = vsel %vm151, %v124, 0
    %v159 = vsel %vm151, %v125, 0
    %v162 = vsel %vm151, %v126, 0
    %164 = vmatpush.msra.mxu0 0.0
    %165 = vmatpush.msra.mxu0 0.0
    %166 = vmatpush.msra.mxu0 0.0
    %167 = vmatpush.msra.mxu0 0.0
    %168 = vmatpush.msra.mxu0 0.0
    %169 = vmatpush.msra.mxu0 0.0
    %170 = vmatpush.msra.mxu0 0.0
    %171 = vmatpush.msra.mxu0 0.0
    %172 = vmatpush.msra.mxu0 0.0
    %173 = vmatpush.msra.mxu0 0.0
    %174 = vmatpush.msra.mxu0 0.0
    %175 = vmatpush.msra.mxu0 0.0
    %176 = vmatpush.msra.mxu0 %v122
    %177 = vmatpush.msra.mxu0 %v121
    %178 = vmatpush.msra.mxu0 %v120
    %179 = vmatpush.msra.mxu0 %v119
    %180 = vmatmul.f32.gmra.mxu0 %v153
    %v181 = vpop.f32.mrf.mxu0
    %v182 = vadd.f32 %v134, %v181
    %183 = vmatmul.f32.gmra.mxu0 %v156
    %v184 = vpop.f32.mrf.mxu0
    %v185 = vadd.f32 %v139, %v184
    %186 = vmatmul.f32.gmra.mxu0 %v159
    %v187 = vpop.f32.mrf.mxu0
    %v188 = vadd.f32 %v144, %v187
    %189 = vmatmul.f32.gmra.mxu0 %v162
    %v190 = vpop.f32.mrf.mxu0
    %v191 = vadd.f32 %v149, %v190
    %192 = vdwg.mxu0
    %v193 = vmul.f32 %v182, 0.5
    %v194 = vmul.f32 %v185, 0.5
    %v195 = vmul.f32 %v188, 0.5
    %v196 = vmul.f32 %v191, 0.5
    %v197 = vtanh.pop %v193
    %v198 = vtanh.pop %v194
    %v199 = vtanh.pop %v195
    %v200 = vtanh.pop %v196
    %v201 = vmul.f32 %v197, 0.5
    %v202 = vmul.f32 %v198, 0.5
    %v203 = vmul.f32 %v199, 0.5
    %v204 = vmul.f32 %v200, 0.5
    %v205 = vadd.f32 %v201, 0.5
    %v206 = vadd.f32 %v202, 0.5
    %v207 = vadd.f32 %v203, 0.5
    %v208 = vadd.f32 %v204, 0.5
    %v209 = vld [vmem:[%s5] sm:$0xff]
    %v210 = vld [vmem:[%s5 + $0x8] sm:$0xff]
    %v211 = vld [vmem:[%s5 + $0x10] sm:$0xff]
    %v212 = vld [vmem:[%s5 + $0x18] sm:$0xff]
    %v213 = vld [vmem:[%s6] sm:$0xff]
    %v214 = vld [vmem:[%s6 + $0x8] sm:$0xff]
    %v215 = vld [vmem:[%s6 + $0x10] sm:$0xff]
    %v216 = vld [vmem:[%s6 + $0x18] sm:$0xff]
    %218 = vset.pattern.permute.xlu0 0
    %219 = vperm.xlu0 %218, %v213
    %v220 = vpop.permute.xlu0 %219
    %223 = vset.pattern.permute.xlu0 0
    %224 = vperm.xlu0 %223, %v214
    %v225 = vpop.permute.xlu0 %224
    %228 = vset.pattern.permute.xlu0 0
    %229 = vperm.xlu0 %228, %v215
    %v230 = vpop.permute.xlu0 %229
    %233 = vset.pattern.permute.xlu0 0
    %234 = vperm.xlu0 %233, %v216
    %v235 = vpop.permute.xlu0 %234
    %v238 = vsel %vm151, %v209, 0
    %v241 = vsel %vm151, %v210, 0
    %v244 = vsel %vm151, %v211, 0
    %v247 = vsel %vm151, %v212, 0
    %249 = vmatpush.msra.mxu0 0.0
    %250 = vmatpush.msra.mxu0 0.0
    %251 = vmatpush.msra.mxu0 0.0
    %252 = vmatpush.msra.mxu0 0.0
    %253 = vmatpush.msra.mxu0 0.0
    %254 = vmatpush.msra.mxu0 0.0
    %255 = vmatpush.msra.mxu0 0.0
    %256 = vmatpush.msra.mxu0 0.0
    %257 = vmatpush.msra.mxu0 0.0
    %258 = vmatpush.msra.mxu0 0.0
    %259 = vmatpush.msra.mxu0 0.0
    %260 = vmatpush.msra.mxu0 0.0
    %261 = vmatpush.msra.mxu0 %v208
    %262 = vmatpush.msra.mxu0 %v207
    %263 = vmatpush.msra.mxu0 %v206
    %264 = vmatpush.msra.mxu0 %v205
    %265 = vmatmul.f32.gmra.mxu0 %v238
    %v266 = vpop.f32.mrf.mxu0
    %v267 = vadd.f32 %v220, %v266
    %268 = vmatmul.f32.gmra.mxu0 %v241
    %v269 = vpop.f32.mrf.mxu0
    %v270 = vadd.f32 %v225, %v269
    %271 = vmatmul.f32.gmra.mxu0 %v244
    %v272 = vpop.f32.mrf.mxu0
    %v273 = vadd.f32 %v230, %v272
    %274 = vmatmul.f32.gmra.mxu0 %v247
    %v275 = vpop.f32.mrf.mxu0
    %v276 = vadd.f32 %v235, %v275
    %277 = vdwg.mxu0
    %v278 = vmul.f32 %v267, 0.5
    %v279 = vmul.f32 %v270, 0.5
    %v280 = vmul.f32 %v273, 0.5
    %v281 = vmul.f32 %v276, 0.5
    %v282 = vtanh.pop %v278
    %v283 = vtanh.pop %v279
    %v284 = vtanh.pop %v280
    %v285 = vtanh.pop %v281
    %v286 = vmul.f32 %v282, 0.5
    %v287 = vmul.f32 %v283, 0.5
    %v288 = vmul.f32 %v284, 0.5
    %v289 = vmul.f32 %v285, 0.5
    %v290 = vadd.f32 %v286, 0.5
    %v291 = vadd.f32 %v287, 0.5
    %v292 = vadd.f32 %v288, 0.5
    %v293 = vadd.f32 %v289, 0.5
    %v294 = vld [vmem:[%s7] sm:$0xff]
    %v295 = vld [vmem:[%s8] sm:$0xff]
    %297 = vset.pattern.permute.xlu0 0
    %298 = vperm.xlu0 %297, %v295
    %v299 = vpop.permute.xlu0 %298
    %v302 = vsel %vm151, %v294, 0
    %304 = vmatpush.msra.mxu0 0.0
    %305 = vmatpush.msra.mxu0 0.0
    %306 = vmatpush.msra.mxu0 0.0
    %307 = vmatpush.msra.mxu0 0.0
    %308 = vmatpush.msra.mxu0 0.0
    %309 = vmatpush.msra.mxu0 0.0
    %310 = vmatpush.msra.mxu0 0.0
    %311 = vmatpush.msra.mxu0 0.0
    %312 = vmatpush.msra.mxu0 0.0
    %313 = vmatpush.msra.mxu0 0.0
    %314 = vmatpush.msra.mxu0 0.0
    %315 = vmatpush.msra.mxu0 0.0
    %316 = vmatpush.msra.mxu0 %v293
    %317 = vmatpush.msra.mxu0 %v292
    %318 = vmatpush.msra.mxu0 %v291
    %319 = vmatpush.msra.mxu0 %v290
    %320 = vmatmul.f32.gmra.mxu0 %v302
    %v321 = vpop.f32.mrf.mxu0
    %v322 = vadd.f32 %v299, %v321
    %323 = vdwg.mxu0
    %v325 = vrot.slane %v322, 4
    %vm327 = vcmask 60416
    %v328 = vsel %vm327, %v322, -inf
    %v329 = vrot.slane %v328, 4
    %v330 = vmax.f32 %v328, %v329
    %v331 = vrot.slane %v330, 2
    %v332 = vmax.f32 %v330, %v331
    %v333 = vrot.slane %v332, 1
    %v334 = vmax.f32 %v332, %v333
    %v335 = vsel %vm327, %v325, -inf
    %v336 = vrot.slane %v335, 4
    %v337 = vmax.f32 %v335, %v336
    %v338 = vrot.slane %v337, 2
    %v339 = vmax.f32 %v337, %v338
    %v340 = vrot.slane %v339, 1
    %v341 = vmax.f32 %v339, %v340
    %v342 = vsub.f32 %v322, %v334
    %v343 = vsub.f32 %v325, %v341
    %v344 = vmul.f32 %v342, 1.442695
    %v345 = vpow.pop %v344
    %v346 = vmul.f32 %v343, 1.442695
    %v347 = vpow.pop %v346
    %v348 = vsel %vm327, %v345, 0.0
    %v349 = vrot.slane %v348, 4
    %v350 = vadd.f32 %v348, %v349
    %v351 = vrot.slane %v350, 2
    %v352 = vadd.f32 %v350, %v351
    %v353 = vrot.slane %v352, 1
    %v354 = vadd.f32 %v352, %v353
    %v355 = vsel %vm327, %v347, 0.0
    %v356 = vrot.slane %v355, 4
    %v357 = vadd.f32 %v355, %v356
    %v358 = vrot.slane %v357, 2
    %v359 = vadd.f32 %v357, %v358
    %v360 = vrot.slane %v359, 1
    %v361 = vadd.f32 %v359, %v360
    %v362 = vrcp.pop %v354
    %v363 = vmul.f32 %v354, %v362
    %v364 = vsub.f32 1.0, %v363
    %v365 = vmul.f32 %v362, %v364
    %v366 = vadd.f32 %v362, %v365
    %vm367 = vweird.f32 %v354
    %vm368 = vweird.f32 %v362
    %vm369 = vmor %vm367, %vm368
    %v370 = vsel %vm369, %v362, %v366
    %v371 = vand.u32 2147483647, %v354
    %vm372 = vcmp.eq.f32.partialorder %v371, 8.507059e+37
    %v373 = vand.u32 %v354, 2147483648
    %v374 = vor.u32 1.1754944e-38, %v373
    %v375 = vsel %vm372, %v374, %v370
    %v376 = vmul.f32 %v345, %v375
    %v377 = vrcp.pop %v361
    %v378 = vmul.f32 %v361, %v377
    %v379 = vsub.f32 1.0, %v378
    %v380 = vmul.f32 %v377, %v379
    %v381 = vadd.f32 %v377, %v380
    %vm382 = vweird.f32 %v361
    %vm383 = vweird.f32 %v377
    %vm384 = vmor %vm382, %vm383
    %v385 = vsel %vm384, %v377, %v381
    %v386 = vand.u32 2147483647, %v361
    %vm387 = vcmp.eq.f32.partialorder %v386, 8.507059e+37
    %v388 = vand.u32 %v361, 2147483648
    %v389 = vor.u32 1.1754944e-38, %v388
    %v390 = vsel %vm387, %v389, %v385
    %v391 = vmul.f32 %v347, %v390
    %394 = vst [vmem:[#allocation1] ss:$2 sm:$0xff] %v376
    %s395 = scalar_lea.vmem [#allocation1], 1
    %396 = vst [vmem:[%s395] ss:$2 sm:$0xff] %v391
    %v397 = vld.sshfl [vmem:[#allocation1] sm:$0xff pattern:$0x75316420]
    %vm399 = vcmask 64512
    %400 = vst.msk [vmem:[#allocation2] sm:$0xff] %vm399, %v397
    // Predicated region
    $region38: #{tpu_custom_call.1} parent=1 // pred_check
      _
    $region39: #{tpu_custom_call.1} parent=1 // pred_check_branch
      %402 = sbr.rel (0) target = $region41
    $region40: #{tpu_custom_call.1} parent=1 // pred_region
      %404 = vsyncadd [#allocation3], 0
      %s406 = sshll.u32 [#allocation2], 4
      %s407 = int_to_ptr.vmem [resolvable:$true] %s406
      %s408 = sshll.u32 %s9, 4
      %s409 = int_to_ptr.hbm [resolvable:$true] %s408
      %411 = dma.vmem_to_hbm [thread:$0]  %s407, 128, %s409, [#allocation3]
    $region41: #{tpu_custom_call.1} parent=1 // pred_fallthru
      _
    // Predicated region
    $region42: #{tpu_custom_call.1} parent=1 // pred_check
      _
    $region43: #{tpu_custom_call.1} parent=1 // pred_check_branch
      %413 = sbr.rel (0) target = $region45
    $region44: #{tpu_custom_call.1} parent=1 // pred_region
      %415 = dma.done [#allocation3], 128
    $region45: #{tpu_custom_call.1} parent=1 // pred_fallthru
      _
    %416 = vsyncpa [#allocation3], 1

</llo_original>
